<compile_context>
chip_gen: v7x
topology: tpu7x:2x2x1
jax: 0.10.0
libtpu: 0.0.40
codegen_flags: <defaults>
</compile_context>

<pallas_src>
import jax
import jax.numpy as jnp
from jax.experimental import pallas as pl
from jax.experimental.pallas import tpu as pltpu

INPUT_SIZE = 1
HIDDEN = 32


def rnn_kernel(pre_ref, h0_ref, w_hh_ref, w_out_ref, b_out_ref, out_ref, hT_ref):
    # pre_ref:   (T, B, H) f32   hoisted x_t * W_ih^T + (b_ih + b_hh)
    # h0_ref:    (B, H)    f32   initial hidden
    # w_hh_ref:  (H, H)    bf16  W_hh^T (pre-cast for the MXU)
    # w_out_ref: (1, 1, H) f32   output-projection row
    # b_out_ref: (1, 1)    f32   output-projection bias
    # out_ref:   (B, T)    f32   per-step linear outputs (dense 2D, single store)
    # hT_ref:    (B, H)    f32   final hidden state
    T = pre_ref.shape[0]

    w_hh = w_hh_ref[...]                 # load recurrent weight once (bf16)
    h = h0_ref[...]                      # hidden carried in vregs (f32)

    hs = []
    # Fully unrolled serial recurrence: one bf16 MXU dot + f32 add + f32 tanh per step.
    for t in range(T):
        z = jnp.dot(h.astype(jnp.bfloat16), w_hh,
                    preferred_element_type=jnp.float32) + pre_ref[t]
        h = jnp.tanh(z)
        hs.append(h)

    hT_ref[...] = h                      # single final-hidden store

    # Deferred Linear(32, 1): stack all hidden states once as (B, T, H), project with
    # an elementwise multiply + lane reduction, then one dense (B, T) writeback.
    hs_all = jnp.stack(hs, axis=1)                                   # (B, T, H)
    y = jnp.sum(hs_all * w_out_ref[...], axis=-1) + b_out_ref[...]   # (B, T)
    out_ref[...] = y


def prepare_params(params):
    """One-time parameter prep: transpose / reshape / cast outside the hot path."""
    w_ih, w_hh, b_ih, b_hh, w_out, b_out = params
    H = HIDDEN
    return (
        w_ih.reshape(1, 1, H).astype(jnp.float32),                 # W_ih^T (input_size==1)
        jnp.asarray(w_hh, jnp.float32).T.astype(jnp.bfloat16),     # W_hh^T, bf16 for MXU
        (b_ih + b_hh).reshape(1, 1, H).astype(jnp.float32),        # combined bias
        w_out.reshape(1, 1, H).astype(jnp.float32),                # output row
        b_out.reshape(1, 1).astype(jnp.float32),                   # output bias
    )


@jax.jit
def rnn_forward(x, h0, prepped):
    """x: (B, T, 1); h0: (B, H). Returns ((B, T, 1), (1, B, H)) like PyTorch."""
    w_ih_row, w_hh_t, b_comb, w_out_row, b_out_2d = prepped
    B, T, _ = x.shape
    H = HIDDEN

    # Hoisted input projection + bias; fuses with the transpose under jit.
    x_tm = jnp.transpose(x.astype(jnp.float32), (1, 0, 2))          # (T, B, 1)
    pre = x_tm * w_ih_row + b_comb                                   # (T, B, H)

    vmem = lambda: pl.BlockSpec(memory_space=pltpu.MemorySpace.VMEM)

    out_bt, hT = pl.pallas_call(
        rnn_kernel,
        out_shape=(jax.ShapeDtypeStruct((B, T), jnp.float32),
                   jax.ShapeDtypeStruct((B, H), jnp.float32)),
        in_specs=[vmem() for _ in range(5)],
        out_specs=(vmem(), vmem()),
    )(pre, h0, w_hh_t, w_out_row, b_out_2d)

    return out_bt[..., None], hT[None]                               # (B,T,1), (1,B,H)


def rnn_reference(x, h_state, params):
    """Pure-JAX f32 reference matching PyTorch nn.RNN + per-step Linear."""
    w_ih, w_hh, b_ih, b_hh, w_out, b_out = params
    B, T, _ = x.shape
    h = jnp.zeros((B, HIDDEN), jnp.float32) if h_state is None else h_state[0]
    outs = []
    for t in range(T):
        h = jnp.tanh(x[:, t, :] @ w_ih.T + b_ih + h @ w_hh.T + b_hh)
        outs.append(h @ w_out.T + b_out)
    return jnp.stack(outs, axis=1), h[None]


if __name__ == "__main__":
    key = jax.random.PRNGKey(0)
    ks = jax.random.split(key, 7)
    bound = 1.0 / float(jnp.sqrt(HIDDEN))

    # Deterministic parameter init (PyTorch-style U(-1/sqrt(H), 1/sqrt(H)))
    w_ih = jax.random.uniform(ks[0], (HIDDEN, INPUT_SIZE), jnp.float32, -bound, bound)
    w_hh = jax.random.uniform(ks[1], (HIDDEN, HIDDEN), jnp.float32, -bound, bound)
    b_ih = jax.random.uniform(ks[2], (HIDDEN,), jnp.float32, -bound, bound)
    b_hh = jax.random.uniform(ks[3], (HIDDEN,), jnp.float32, -bound, bound)
    w_out = jax.random.uniform(ks[4], (1, HIDDEN), jnp.float32, -bound, bound)
    b_out = jax.random.uniform(ks[5], (1,), jnp.float32, -bound, bound)
    params = (w_ih, w_hh, b_ih, b_hh, w_out, b_out)
    prepped = prepare_params(params)

    B, T = 2, 8
    x = jax.random.normal(ks[6], (B, T, INPUT_SIZE), jnp.float32)
    h_state = None                       # matches the script's initial h_state = None
    h0 = jnp.zeros((B, HIDDEN), jnp.float32)

    outs, hT = rnn_forward(x, h0, prepped)
    jax.block_until_ready((outs, hT))

    ref_outs, ref_h = rnn_reference(x, h_state, params)
    assert outs.shape == (B, T, 1) and hT.shape == (1, B, HIDDEN)
    # bf16 recurrent matmul on the MXU -> loosened tolerance vs. the f32 reference.
    assert jnp.allclose(outs, ref_outs, atol=3e-2, rtol=3e-2), "output mismatch"
    assert jnp.allclose(hT, ref_h, atol=3e-2, rtol=3e-2), "hidden state mismatch"
    print("KERNEL_OK")
</pallas_src>

<mosaic_0001>
module attributes {stable_mosaic.version = 11 : i64} {
  func.func @rnn_kernel(%arg0: memref<8x2x32xf32, #tpu.memory_space<vmem>>, %arg1: memref<2x32xf32, #tpu.memory_space<vmem>>, %arg2: memref<32x32xbf16, #tpu.memory_space<vmem>>, %arg3: memref<1x1x32xf32, #tpu.memory_space<vmem>>, %arg4: memref<1x1xf32, #tpu.memory_space<vmem>>, %arg5: memref<2x8xf32, #tpu.memory_space<vmem>>, %arg6: memref<2x32xf32, #tpu.memory_space<vmem>>) attributes {dimension_semantics = [], scalar_prefetch = 0 : i64, scratch_operands = 0 : i64, tpu.core_type = #tpu.core_type<tc>} {
    %c0 = arith.constant 0 : index
    %c0_0 = arith.constant 0 : index
    %0 = vector.load %arg2[%c0, %c0_0] : memref<32x32xbf16, #tpu.memory_space<vmem>>, vector<32x32xbf16>
    %c0_1 = arith.constant 0 : index
    %c0_2 = arith.constant 0 : index
    %1 = vector.load %arg1[%c0_1, %c0_2] : memref<2x32xf32, #tpu.memory_space<vmem>>, vector<2x32xf32>
    %2 = arith.truncf %1 : vector<2x32xf32> to vector<2x32xbf16>
    %cst = arith.constant dense<0.000000e+00> : vector<2x32xf32>
    %3 = tpu.matmul %2, %0, %cst {dimension_numbers = #tpu.dot_dimension_numbers<[1], [0], [0], [1], [0, 0, 1, 1], [], []>} : vector<2x32xbf16>, vector<32x32xbf16>, vector<2x32xf32> -> vector<2x32xf32>
    %c0_3 = arith.constant 0 : index
    %c0_4 = arith.constant 0 : index
    %c0_5 = arith.constant 0 : index
    %4 = vector.load %arg0[%c0_3, %c0_4, %c0_5] : memref<8x2x32xf32, #tpu.memory_space<vmem>>, vector<1x2x32xf32>
    %5 = vector.shape_cast %4 : vector<1x2x32xf32> to vector<2x32xf32>
    %6 = arith.addf %3, %5 : vector<2x32xf32>
    %7 = math.tanh %6 : vector<2x32xf32>
    %8 = arith.truncf %7 : vector<2x32xf32> to vector<2x32xbf16>
    %cst_6 = arith.constant dense<0.000000e+00> : vector<2x32xf32>
    %9 = tpu.matmul %8, %0, %cst_6 {dimension_numbers = #tpu.dot_dimension_numbers<[1], [0], [0], [1], [0, 0, 1, 1], [], []>} : vector<2x32xbf16>, vector<32x32xbf16>, vector<2x32xf32> -> vector<2x32xf32>
    %c1 = arith.constant 1 : index
    %c0_7 = arith.constant 0 : index
    %c0_8 = arith.constant 0 : index
    %10 = vector.load %arg0[%c1, %c0_7, %c0_8] : memref<8x2x32xf32, #tpu.memory_space<vmem>>, vector<1x2x32xf32>
    %11 = vector.shape_cast %10 : vector<1x2x32xf32> to vector<2x32xf32>
    %12 = arith.addf %9, %11 : vector<2x32xf32>
    %13 = math.tanh %12 : vector<2x32xf32>
    %14 = arith.truncf %13 : vector<2x32xf32> to vector<2x32xbf16>
    %cst_9 = arith.constant dense<0.000000e+00> : vector<2x32xf32>
    %15 = tpu.matmul %14, %0, %cst_9 {dimension_numbers = #tpu.dot_dimension_numbers<[1], [0], [0], [1], [0, 0, 1, 1], [], []>} : vector<2x32xbf16>, vector<32x32xbf16>, vector<2x32xf32> -> vector<2x32xf32>
    %c2 = arith.constant 2 : index
    %c0_10 = arith.constant 0 : index
    %c0_11 = arith.constant 0 : index
    %16 = vector.load %arg0[%c2, %c0_10, %c0_11] : memref<8x2x32xf32, #tpu.memory_space<vmem>>, vector<1x2x32xf32>
    %17 = vector.shape_cast %16 : vector<1x2x32xf32> to vector<2x32xf32>
    %18 = arith.addf %15, %17 : vector<2x32xf32>
    %19 = math.tanh %18 : vector<2x32xf32>
    %20 = arith.truncf %19 : vector<2x32xf32> to vector<2x32xbf16>
    %cst_12 = arith.constant dense<0.000000e+00> : vector<2x32xf32>
    %21 = tpu.matmul %20, %0, %cst_12 {dimension_numbers = #tpu.dot_dimension_numbers<[1], [0], [0], [1], [0, 0, 1, 1], [], []>} : vector<2x32xbf16>, vector<32x32xbf16>, vector<2x32xf32> -> vector<2x32xf32>
    %c3 = arith.constant 3 : index
    %c0_13 = arith.constant 0 : index
    %c0_14 = arith.constant 0 : index
    %22 = vector.load %arg0[%c3, %c0_13, %c0_14] : memref<8x2x32xf32, #tpu.memory_space<vmem>>, vector<1x2x32xf32>
    %23 = vector.shape_cast %22 : vector<1x2x32xf32> to vector<2x32xf32>
    %24 = arith.addf %21, %23 : vector<2x32xf32>
    %25 = math.tanh %24 : vector<2x32xf32>
    %26 = arith.truncf %25 : vector<2x32xf32> to vector<2x32xbf16>
    %cst_15 = arith.constant dense<0.000000e+00> : vector<2x32xf32>
    %27 = tpu.matmul %26, %0, %cst_15 {dimension_numbers = #tpu.dot_dimension_numbers<[1], [0], [0], [1], [0, 0, 1, 1], [], []>} : vector<2x32xbf16>, vector<32x32xbf16>, vector<2x32xf32> -> vector<2x32xf32>
    %c4 = arith.constant 4 : index
    %c0_16 = arith.constant 0 : index
    %c0_17 = arith.constant 0 : index
    %28 = vector.load %arg0[%c4, %c0_16, %c0_17] : memref<8x2x32xf32, #tpu.memory_space<vmem>>, vector<1x2x32xf32>
    %29 = vector.shape_cast %28 : vector<1x2x32xf32> to vector<2x32xf32>
    %30 = arith.addf %27, %29 : vector<2x32xf32>
    %31 = math.tanh %30 : vector<2x32xf32>
    %32 = arith.truncf %31 : vector<2x32xf32> to vector<2x32xbf16>
    %cst_18 = arith.constant dense<0.000000e+00> : vector<2x32xf32>
    %33 = tpu.matmul %32, %0, %cst_18 {dimension_numbers = #tpu.dot_dimension_numbers<[1], [0], [0], [1], [0, 0, 1, 1], [], []>} : vector<2x32xbf16>, vector<32x32xbf16>, vector<2x32xf32> -> vector<2x32xf32>
    %c5 = arith.constant 5 : index
    %c0_19 = arith.constant 0 : index
    %c0_20 = arith.constant 0 : index
    %34 = vector.load %arg0[%c5, %c0_19, %c0_20] : memref<8x2x32xf32, #tpu.memory_space<vmem>>, vector<1x2x32xf32>
    %35 = vector.shape_cast %34 : vector<1x2x32xf32> to vector<2x32xf32>
    %36 = arith.addf %33, %35 : vector<2x32xf32>
    %37 = math.tanh %36 : vector<2x32xf32>
    %38 = arith.truncf %37 : vector<2x32xf32> to vector<2x32xbf16>
    %cst_21 = arith.constant dense<0.000000e+00> : vector<2x32xf32>
    %39 = tpu.matmul %38, %0, %cst_21 {dimension_numbers = #tpu.dot_dimension_numbers<[1], [0], [0], [1], [0, 0, 1, 1], [], []>} : vector<2x32xbf16>, vector<32x32xbf16>, vector<2x32xf32> -> vector<2x32xf32>
    %c6 = arith.constant 6 : index
    %c0_22 = arith.constant 0 : index
    %c0_23 = arith.constant 0 : index
    %40 = vector.load %arg0[%c6, %c0_22, %c0_23] : memref<8x2x32xf32, #tpu.memory_space<vmem>>, vector<1x2x32xf32>
    %41 = vector.shape_cast %40 : vector<1x2x32xf32> to vector<2x32xf32>
    %42 = arith.addf %39, %41 : vector<2x32xf32>
    %43 = math.tanh %42 : vector<2x32xf32>
    %44 = arith.truncf %43 : vector<2x32xf32> to vector<2x32xbf16>
    %cst_24 = arith.constant dense<0.000000e+00> : vector<2x32xf32>
    %45 = tpu.matmul %44, %0, %cst_24 {dimension_numbers = #tpu.dot_dimension_numbers<[1], [0], [0], [1], [0, 0, 1, 1], [], []>} : vector<2x32xbf16>, vector<32x32xbf16>, vector<2x32xf32> -> vector<2x32xf32>
    %c7 = arith.constant 7 : index
    %c0_25 = arith.constant 0 : index
    %c0_26 = arith.constant 0 : index
    %46 = vector.load %arg0[%c7, %c0_25, %c0_26] : memref<8x2x32xf32, #tpu.memory_space<vmem>>, vector<1x2x32xf32>
    %47 = vector.shape_cast %46 : vector<1x2x32xf32> to vector<2x32xf32>
    %48 = arith.addf %45, %47 : vector<2x32xf32>
    %49 = math.tanh %48 : vector<2x32xf32>
    %c0_27 = arith.constant 0 : index
    %c0_28 = arith.constant 0 : index
    %50 = vector.load %arg6[%c0_27, %c0_28] : memref<2x32xf32, #tpu.memory_space<vmem>>, vector<2x32xf32>
    tpu.vector_store %arg6[%c0_27, %c0_28], %49 {strides = array<i32>} : memref<2x32xf32, #tpu.memory_space<vmem>>, vector<2x32xf32>,
    %51 = vector.shape_cast %7 : vector<2x32xf32> to vector<2x1x32xf32>
    %52 = vector.shape_cast %13 : vector<2x32xf32> to vector<2x1x32xf32>
    %53 = vector.shape_cast %19 : vector<2x32xf32> to vector<2x1x32xf32>
    %54 = vector.shape_cast %25 : vector<2x32xf32> to vector<2x1x32xf32>
    %55 = vector.shape_cast %31 : vector<2x32xf32> to vector<2x1x32xf32>
    %56 = vector.shape_cast %37 : vector<2x32xf32> to vector<2x1x32xf32>
    %57 = vector.shape_cast %43 : vector<2x32xf32> to vector<2x1x32xf32>
    %58 = vector.shape_cast %49 : vector<2x32xf32> to vector<2x1x32xf32>
    %59 = tpu.concatenate %51, %52, %53, %54, %55, %56, %57, %58 in 1 : vector<2x1x32xf32>, vector<2x1x32xf32>, vector<2x1x32xf32>, vector<2x1x32xf32>, vector<2x1x32xf32>, vector<2x1x32xf32>, vector<2x1x32xf32>, vector<2x1x32xf32> -> vector<2x8x32xf32>
    %c0_29 = arith.constant 0 : index
    %c0_30 = arith.constant 0 : index
    %c0_31 = arith.constant 0 : index
    %60 = vector.load %arg3[%c0_29, %c0_30, %c0_31] : memref<1x1x32xf32, #tpu.memory_space<vmem>>, vector<1x1x32xf32>
    %61 = vector.broadcast %60 : vector<1x1x32xf32> to vector<2x8x32xf32>
    %62 = arith.mulf %59, %61 : vector<2x8x32xf32>
    %cst_32 = arith.constant dense<0.000000e+00> : vector<2x8xf32>
    %63 = vector.multi_reduction <add>, %62, %cst_32 [2] : vector<2x8x32xf32> to vector<2x8xf32>
    %c0_33 = arith.constant 0 : index
    %c0_34 = arith.constant 0 : index
    %64 = vector.load %arg4[%c0_33, %c0_34] : memref<1x1xf32, #tpu.memory_space<vmem>>, vector<1x1xf32>
    %65 = vector.broadcast %64 : vector<1x1xf32> to vector<2x8xf32>
    %66 = arith.addf %63, %65 : vector<2x8xf32>
    %c0_35 = arith.constant 0 : index
    %c0_36 = arith.constant 0 : index
    %67 = vector.load %arg5[%c0_35, %c0_36] : memref<2x8xf32, #tpu.memory_space<vmem>>, vector<2x8xf32>
    tpu.vector_store %arg5[%c0_35, %c0_36], %66 {strides = array<i32>} : memref<2x8xf32, #tpu.memory_space<vmem>>, vector<2x8xf32>,
    return
  }
}

</mosaic_0001>

<llo_original>
// kernel: rnn_forward.1
$region0: #{rnn_forward.1}
  #allocation0 [shape = 'u32[]', space=smem, size = 0x4, offset = 0x4, fixed_abs, tag = 'smem constant byte address 0x4 - core index']
  #allocation1 [shape = 'u32[144,128]{1,0:T(1,128)}', space=vmem, size = 0x12000, scoped, tag = 'internal scratch']
  #allocation2 [shape = 'f32[1,1]{1,0:T(1,128)S(1)}', space=vmem, size = 0x200, scoped, tag = 'scoped memory for rnn_forward.1']
  %s0 = inlined_call_operand.vmem [shape: f32[8,2,32], index: 0, kind: input, shape index: {}]
  %s1 = inlined_call_operand.vmem [shape: f32[2,32], index: 1, kind: input, shape index: {}]
  %s2 = inlined_call_operand.vmem [shape: bf16[32,32], index: 2, kind: input, shape index: {}]
  %s3 = inlined_call_operand.vmem [shape: f32[1,1,32], index: 3, kind: input, shape index: {}]
  %s4 = inlined_call_operand.<no memory space> [shape: f32[1,1], index: 4, kind: input, shape index: {}]
  %s5 = inlined_call_operand.hbm [shape: f32[2,8], index: 5, kind: output, shape index: {0}]
  %s6 = inlined_call_operand.hbm [shape: f32[2,32], index: 6, kind: output, shape index: {1}]
  %7 = xla_tuple %s5, %s6
  %s8 = sld [smem:[#allocation0]]
  $region38: #{rnn_forward.1} parent=0
    _
  %s10 = ssub.s32 1, %s8
  %s11 = scalar_select 0, %s10, %s8
  %v12 = vstv %s4
  %13 = vst [vmem:[#allocation2] sm:$0x1] %v12
  $region1: #{rnn_forward.1} parent=0
    #allocation3 [shape = 'u8[1024]{0}', space=vmem, size = 0x400, scoped, tag = 'output window, operand 0, single buffered']
    #allocation4 [shape = 's32[1]{0}', space=sflag, size = 0x4, scoped, tag = 'scoped memory for rnn_forward.1']
    #allocation5 [shape = 'u8[1024]{0}', space=vmem, size = 0x400, scoped, tag = 'output window, operand 1, single buffered']
    #allocation6 [shape = 's32[1]{0}', space=sflag, size = 0x4, scoped, tag = 'scoped memory for rnn_forward.1']
    %14 = vsyncpa [#allocation4], 0
    %15 = vsyncpa [#allocation6], 0
    // Predicated region
    $region2: #{rnn_forward.1} parent=1 // pred_check
      _
    $region3: #{rnn_forward.1} parent=1 // pred_check_branch
      %17 = sbr.rel (0) target = $region5
    $region4: #{rnn_forward.1} parent=1 // pred_region
      _
    $region5: #{rnn_forward.1} parent=1 // pred_fallthru
      _
    // Predicated region
    $region6: #{rnn_forward.1} parent=1 // pred_check
      _
    $region7: #{rnn_forward.1} parent=1 // pred_check_branch
      %19 = sbr.rel (0) target = $region9
    $region8: #{rnn_forward.1} parent=1 // pred_region
      _
    $region9: #{rnn_forward.1} parent=1 // pred_fallthru
      _
    // Predicated region
    $region10: #{rnn_forward.1} parent=1 // pred_check
      _
    $region11: #{rnn_forward.1} parent=1 // pred_check_branch
      %21 = sbr.rel (0) target = $region13
    $region12: #{rnn_forward.1} parent=1 // pred_region
      _
    $region13: #{rnn_forward.1} parent=1 // pred_fallthru
      _
    // Predicated region
    $region14: #{rnn_forward.1} parent=1 // pred_check
      _
    $region15: #{rnn_forward.1} parent=1 // pred_check_branch
      %23 = sbr.rel (0) target = $region17
    $region16: #{rnn_forward.1} parent=1 // pred_region
      _
    $region17: #{rnn_forward.1} parent=1 // pred_fallthru
      _
    // Predicated region
    $region18: #{rnn_forward.1} parent=1 // pred_check
      _
    $region19: #{rnn_forward.1} parent=1 // pred_check_branch
      %25 = sbr.rel (0) target = $region21
    $region20: #{rnn_forward.1} parent=1 // pred_region
      _
    $region21: #{rnn_forward.1} parent=1 // pred_fallthru
      _
    %v27 = vld [vmem:[%s2] sm:$0xf]
    %v28 = vld [vmem:[%s2 + $0x4] sm:$0xf]
    %v29 = vld [vmem:[%s2 + $0x8] sm:$0xf]
    %v30 = vld [vmem:[%s2 + $0xc] sm:$0xf]
    %v31 = vld [vmem:[%s1] sm:$0x3]
    %v32 = vpack.c.bf16 %v31, %v31
    %v33 = vld [vmem:[%s0] sm:$0x3]
    %v38 = vunpack.c.l.b16 %v27
    %v39 = vunpack.c.l.b16 %v28
    %v40 = vunpack.c.l.b16 %v29
    %v41 = vunpack.c.l.b16 %v30
    %v42 = vpack.c.b16 %v39, %v38
    %v43 = vpack.c.b16 %v41, %v40
    %vm46 = vcmask 261120
    %v48 = vsel %vm46, %v32, 0
    %50 = vmatprep.subr.bf16.mxu0 0
    %51 = vmatpush1.bf16.msra.mxu0 %v42
    %52 = vmatprep.subr.bf16.mxu0 0
    %53 = vmatpush1.bf16.msra.mxu0 %v43
    %54 = vmatprep.subr.bf16.mxu0 0
    %55 = vmatpush1.bf16.msra.mxu0 0
    %56 = vmatprep.subr.bf16.mxu0 0
    %57 = vmatpush1.bf16.msra.mxu0 0
    %58 = vmatprep.subr.bf16.mxu0 0
    %59 = vmatpush1.bf16.msra.mxu0 0
    %60 = vmatprep.subr.bf16.mxu0 0
    %61 = vmatpush1.bf16.msra.mxu0 0
    %62 = vmatprep.subr.bf16.mxu0 0
    %63 = vmatpush1.bf16.msra.mxu0 0
    %64 = vmatprep.subr.bf16.mxu0 0
    %65 = vmatpush1.bf16.msra.mxu0 0
    %66 = vmatprep.subr.bf16.mxu0 0
    %67 = vmatpush1.bf16.msra.mxu0 0
    %68 = vmatprep.subr.bf16.mxu0 0
    %69 = vmatpush1.bf16.msra.mxu0 0
    %70 = vmatprep.subr.bf16.mxu0 0
    %71 = vmatpush1.bf16.msra.mxu0 0
    %72 = vmatprep.subr.bf16.mxu0 0
    %73 = vmatpush1.bf16.msra.mxu0 0
    %74 = vmatprep.subr.bf16.mxu0 0
    %75 = vmatpush1.bf16.msra.mxu0 0
    %76 = vmatprep.subr.bf16.mxu0 0
    %77 = vmatpush1.bf16.msra.mxu0 0
    %78 = vmatprep.subr.bf16.mxu0 0
    %79 = vmatpush1.bf16.msra.mxu0 0
    %80 = vmatprep.subr.bf16.mxu0 0
    %81 = vmatpush1.bf16.msra.mxu0 0
    %82 = vmatprep.mubr.bf16.mxu0 0
    %83 = vmatmul.mubr.bf16.gmra.mrb[0].mxu0 %v48
    %v84 = vpop.f32.mrb[0].mxu0
    %v85 = vadd.f32 %v33, %v84
    %v86 = vpop.f32.mrb[0].mxu0
    %v87 = vpop.f32.mrb[0].mxu0
    %v88 = vpop.f32.mrb[0].mxu0
    %89 = vdwg.mxu0
    %v90 = vtanh.pop %v85
    %v91 = vpack.c.bf16 %v90, %v90
    %s92 = scalar_lea.vmem %s0, 2
    %v93 = vld [vmem:[%s92] sm:$0x3]
    %v95 = vsel %vm46, %v91, 0
    %97 = vmatprep.subr.bf16.mxu0 0
    %98 = vmatpush1.bf16.msra.mxu0 %v42
    %99 = vmatprep.subr.bf16.mxu0 0
    %100 = vmatpush1.bf16.msra.mxu0 %v43
    %101 = vmatprep.subr.bf16.mxu0 0
    %102 = vmatpush1.bf16.msra.mxu0 0
    %103 = vmatprep.subr.bf16.mxu0 0
    %104 = vmatpush1.bf16.msra.mxu0 0
    %105 = vmatprep.subr.bf16.mxu0 0
    %106 = vmatpush1.bf16.msra.mxu0 0
    %107 = vmatprep.subr.bf16.mxu0 0
    %108 = vmatpush1.bf16.msra.mxu0 0
    %109 = vmatprep.subr.bf16.mxu0 0
    %110 = vmatpush1.bf16.msra.mxu0 0
    %111 = vmatprep.subr.bf16.mxu0 0
    %112 = vmatpush1.bf16.msra.mxu0 0
    %113 = vmatprep.subr.bf16.mxu0 0
    %114 = vmatpush1.bf16.msra.mxu0 0
    %115 = vmatprep.subr.bf16.mxu0 0
    %116 = vmatpush1.bf16.msra.mxu0 0
    %117 = vmatprep.subr.bf16.mxu0 0
    %118 = vmatpush1.bf16.msra.mxu0 0
    %119 = vmatprep.subr.bf16.mxu0 0
    %120 = vmatpush1.bf16.msra.mxu0 0
    %121 = vmatprep.subr.bf16.mxu0 0
    %122 = vmatpush1.bf16.msra.mxu0 0
    %123 = vmatprep.subr.bf16.mxu0 0
    %124 = vmatpush1.bf16.msra.mxu0 0
    %125 = vmatprep.subr.bf16.mxu0 0
    %126 = vmatpush1.bf16.msra.mxu0 0
    %127 = vmatprep.subr.bf16.mxu0 0
    %128 = vmatpush1.bf16.msra.mxu0 0
    %129 = vmatprep.mubr.bf16.mxu0 0
    %130 = vmatmul.mubr.bf16.gmra.mrb[0].mxu0 %v95
    %v131 = vpop.f32.mrb[0].mxu0
    %v132 = vadd.f32 %v93, %v131
    %v133 = vpop.f32.mrb[0].mxu0
    %v134 = vpop.f32.mrb[0].mxu0
    %v135 = vpop.f32.mrb[0].mxu0
    %136 = vdwg.mxu0
    %v137 = vtanh.pop %v132
    %v138 = vpack.c.bf16 %v137, %v137
    %s139 = scalar_lea.vmem %s0, 4
    %v140 = vld [vmem:[%s139] sm:$0x3]
    %v142 = vsel %vm46, %v138, 0
    %144 = vmatprep.subr.bf16.mxu0 0
    %145 = vmatpush1.bf16.msra.mxu0 %v42
    %146 = vmatprep.subr.bf16.mxu0 0
    %147 = vmatpush1.bf16.msra.mxu0 %v43
    %148 = vmatprep.subr.bf16.mxu0 0
    %149 = vmatpush1.bf16.msra.mxu0 0
    %150 = vmatprep.subr.bf16.mxu0 0
    %151 = vmatpush1.bf16.msra.mxu0 0
    %152 = vmatprep.subr.bf16.mxu0 0
    %153 = vmatpush1.bf16.msra.mxu0 0
    %154 = vmatprep.subr.bf16.mxu0 0
    %155 = vmatpush1.bf16.msra.mxu0 0
    %156 = vmatprep.subr.bf16.mxu0 0
    %157 = vmatpush1.bf16.msra.mxu0 0
    %158 = vmatprep.subr.bf16.mxu0 0
    %159 = vmatpush1.bf16.msra.mxu0 0
    %160 = vmatprep.subr.bf16.mxu0 0
    %161 = vmatpush1.bf16.msra.mxu0 0
    %162 = vmatprep.subr.bf16.mxu0 0
    %163 = vmatpush1.bf16.msra.mxu0 0
    %164 = vmatprep.subr.bf16.mxu0 0
    %165 = vmatpush1.bf16.msra.mxu0 0
    %166 = vmatprep.subr.bf16.mxu0 0
    %167 = vmatpush1.bf16.msra.mxu0 0
    %168 = vmatprep.subr.bf16.mxu0 0
    %169 = vmatpush1.bf16.msra.mxu0 0
    %170 = vmatprep.subr.bf16.mxu0 0
    %171 = vmatpush1.bf16.msra.mxu0 0
    %172 = vmatprep.subr.bf16.mxu0 0
    %173 = vmatpush1.bf16.msra.mxu0 0
    %174 = vmatprep.subr.bf16.mxu0 0
    %175 = vmatpush1.bf16.msra.mxu0 0
    %176 = vmatprep.mubr.bf16.mxu0 0
    %177 = vmatmul.mubr.bf16.gmra.mrb[0].mxu0 %v142
    %v178 = vpop.f32.mrb[0].mxu0
    %v179 = vadd.f32 %v140, %v178
    %v180 = vpop.f32.mrb[0].mxu0
    %v181 = vpop.f32.mrb[0].mxu0
    %v182 = vpop.f32.mrb[0].mxu0
    %183 = vdwg.mxu0
    %v184 = vtanh.pop %v179
    %v185 = vpack.c.bf16 %v184, %v184
    %s186 = scalar_lea.vmem %s0, 6
    %v187 = vld [vmem:[%s186] sm:$0x3]
    %v189 = vsel %vm46, %v185, 0
    %191 = vmatprep.subr.bf16.mxu0 0
    %192 = vmatpush1.bf16.msra.mxu0 %v42
    %193 = vmatprep.subr.bf16.mxu0 0
    %194 = vmatpush1.bf16.msra.mxu0 %v43
    %195 = vmatprep.subr.bf16.mxu0 0
    %196 = vmatpush1.bf16.msra.mxu0 0
    %197 = vmatprep.subr.bf16.mxu0 0
    %198 = vmatpush1.bf16.msra.mxu0 0
    %199 = vmatprep.subr.bf16.mxu0 0
    %200 = vmatpush1.bf16.msra.mxu0 0
    %201 = vmatprep.subr.bf16.mxu0 0
    %202 = vmatpush1.bf16.msra.mxu0 0
    %203 = vmatprep.subr.bf16.mxu0 0
    %204 = vmatpush1.bf16.msra.mxu0 0
    %205 = vmatprep.subr.bf16.mxu0 0
    %206 = vmatpush1.bf16.msra.mxu0 0
    %207 = vmatprep.subr.bf16.mxu0 0
    %208 = vmatpush1.bf16.msra.mxu0 0
    %209 = vmatprep.subr.bf16.mxu0 0
    %210 = vmatpush1.bf16.msra.mxu0 0
    %211 = vmatprep.subr.bf16.mxu0 0
    %212 = vmatpush1.bf16.msra.mxu0 0
    %213 = vmatprep.subr.bf16.mxu0 0
    %214 = vmatpush1.bf16.msra.mxu0 0
    %215 = vmatprep.subr.bf16.mxu0 0
    %216 = vmatpush1.bf16.msra.mxu0 0
    %217 = vmatprep.subr.bf16.mxu0 0
    %218 = vmatpush1.bf16.msra.mxu0 0
    %219 = vmatprep.subr.bf16.mxu0 0
    %220 = vmatpush1.bf16.msra.mxu0 0
    %221 = vmatprep.subr.bf16.mxu0 0
    %222 = vmatpush1.bf16.msra.mxu0 0
    %223 = vmatprep.mubr.bf16.mxu0 0
    %224 = vmatmul.mubr.bf16.gmra.mrb[0].mxu0 %v189
    %v225 = vpop.f32.mrb[0].mxu0
    %v226 = vadd.f32 %v187, %v225
    %v227 = vpop.f32.mrb[0].mxu0
    %v228 = vpop.f32.mrb[0].mxu0
    %v229 = vpop.f32.mrb[0].mxu0
    %230 = vdwg.mxu0
    %v231 = vtanh.pop %v226
    %v232 = vpack.c.bf16 %v231, %v231
    %s233 = scalar_lea.vmem %s0, 8
    %v234 = vld [vmem:[%s233] sm:$0x3]
    %v236 = vsel %vm46, %v232, 0
    %238 = vmatprep.subr.bf16.mxu0 0
    %239 = vmatpush1.bf16.msra.mxu0 %v42
    %240 = vmatprep.subr.bf16.mxu0 0
    %241 = vmatpush1.bf16.msra.mxu0 %v43
    %242 = vmatprep.subr.bf16.mxu0 0
    %243 = vmatpush1.bf16.msra.mxu0 0
    %244 = vmatprep.subr.bf16.mxu0 0
    %245 = vmatpush1.bf16.msra.mxu0 0
    %246 = vmatprep.subr.bf16.mxu0 0
    %247 = vmatpush1.bf16.msra.mxu0 0
    %248 = vmatprep.subr.bf16.mxu0 0
    %249 = vmatpush1.bf16.msra.mxu0 0
    %250 = vmatprep.subr.bf16.mxu0 0
    %251 = vmatpush1.bf16.msra.mxu0 0
    %252 = vmatprep.subr.bf16.mxu0 0
    %253 = vmatpush1.bf16.msra.mxu0 0
    %254 = vmatprep.subr.bf16.mxu0 0
    %255 = vmatpush1.bf16.msra.mxu0 0
    %256 = vmatprep.subr.bf16.mxu0 0
    %257 = vmatpush1.bf16.msra.mxu0 0
    %258 = vmatprep.subr.bf16.mxu0 0
    %259 = vmatpush1.bf16.msra.mxu0 0
    %260 = vmatprep.subr.bf16.mxu0 0
    %261 = vmatpush1.bf16.msra.mxu0 0
    %262 = vmatprep.subr.bf16.mxu0 0
    %263 = vmatpush1.bf16.msra.mxu0 0
    %264 = vmatprep.subr.bf16.mxu0 0
    %265 = vmatpush1.bf16.msra.mxu0 0
    %266 = vmatprep.subr.bf16.mxu0 0
    %267 = vmatpush1.bf16.msra.mxu0 0
    %268 = vmatprep.subr.bf16.mxu0 0
    %269 = vmatpush1.bf16.msra.mxu0 0
    %270 = vmatprep.mubr.bf16.mxu0 0
    %271 = vmatmul.mubr.bf16.gmra.mrb[0].mxu0 %v236
    %v272 = vpop.f32.mrb[0].mxu0
    %v273 = vadd.f32 %v234, %v272
    %v274 = vpop.f32.mrb[0].mxu0
    %v275 = vpop.f32.mrb[0].mxu0
    %v276 = vpop.f32.mrb[0].mxu0
    %277 = vdwg.mxu0
    %v278 = vtanh.pop %v273
    %v279 = vpack.c.bf16 %v278, %v278
    %s280 = scalar_lea.vmem %s0, 10
    %v281 = vld [vmem:[%s280] sm:$0x3]
    %v283 = vsel %vm46, %v279, 0
    %285 = vmatprep.subr.bf16.mxu0 0
    %286 = vmatpush1.bf16.msra.mxu0 %v42
    %287 = vmatprep.subr.bf16.mxu0 0
    %288 = vmatpush1.bf16.msra.mxu0 %v43
    %289 = vmatprep.subr.bf16.mxu0 0
    %290 = vmatpush1.bf16.msra.mxu0 0
    %291 = vmatprep.subr.bf16.mxu0 0
    %292 = vmatpush1.bf16.msra.mxu0 0
    %293 = vmatprep.subr.bf16.mxu0 0
    %294 = vmatpush1.bf16.msra.mxu0 0
    %295 = vmatprep.subr.bf16.mxu0 0
    %296 = vmatpush1.bf16.msra.mxu0 0
    %297 = vmatprep.subr.bf16.mxu0 0
    %298 = vmatpush1.bf16.msra.mxu0 0
    %299 = vmatprep.subr.bf16.mxu0 0
    %300 = vmatpush1.bf16.msra.mxu0 0
    %301 = vmatprep.subr.bf16.mxu0 0
    %302 = vmatpush1.bf16.msra.mxu0 0
    %303 = vmatprep.subr.bf16.mxu0 0
    %304 = vmatpush1.bf16.msra.mxu0 0
    %305 = vmatprep.subr.bf16.mxu0 0
    %306 = vmatpush1.bf16.msra.mxu0 0
    %307 = vmatprep.subr.bf16.mxu0 0
    %308 = vmatpush1.bf16.msra.mxu0 0
    %309 = vmatprep.subr.bf16.mxu0 0
    %310 = vmatpush1.bf16.msra.mxu0 0
    %311 = vmatprep.subr.bf16.mxu0 0
    %312 = vmatpush1.bf16.msra.mxu0 0
    %313 = vmatprep.subr.bf16.mxu0 0
    %314 = vmatpush1.bf16.msra.mxu0 0
    %315 = vmatprep.subr.bf16.mxu0 0
    %316 = vmatpush1.bf16.msra.mxu0 0
    %317 = vmatprep.mubr.bf16.mxu0 0
    %318 = vmatmul.mubr.bf16.gmra.mrb[0].mxu0 %v283
    %v319 = vpop.f32.mrb[0].mxu0
    %v320 = vadd.f32 %v281, %v319
    %v321 = vpop.f32.mrb[0].mxu0
    %v322 = vpop.f32.mrb[0].mxu0
    %v323 = vpop.f32.mrb[0].mxu0
    %324 = vdwg.mxu0
    %v325 = vtanh.pop %v320
    %v326 = vpack.c.bf16 %v325, %v325
    %s327 = scalar_lea.vmem %s0, 12
    %v328 = vld [vmem:[%s327] sm:$0x3]
    %v330 = vsel %vm46, %v326, 0
    %332 = vmatprep.subr.bf16.mxu0 0
    %333 = vmatpush1.bf16.msra.mxu0 %v42
    %334 = vmatprep.subr.bf16.mxu0 0
    %335 = vmatpush1.bf16.msra.mxu0 %v43
    %336 = vmatprep.subr.bf16.mxu0 0
    %337 = vmatpush1.bf16.msra.mxu0 0
    %338 = vmatprep.subr.bf16.mxu0 0
    %339 = vmatpush1.bf16.msra.mxu0 0
    %340 = vmatprep.subr.bf16.mxu0 0
    %341 = vmatpush1.bf16.msra.mxu0 0
    %342 = vmatprep.subr.bf16.mxu0 0
    %343 = vmatpush1.bf16.msra.mxu0 0
    %344 = vmatprep.subr.bf16.mxu0 0
    %345 = vmatpush1.bf16.msra.mxu0 0
    %346 = vmatprep.subr.bf16.mxu0 0
    %347 = vmatpush1.bf16.msra.mxu0 0
    %348 = vmatprep.subr.bf16.mxu0 0
    %349 = vmatpush1.bf16.msra.mxu0 0
    %350 = vmatprep.subr.bf16.mxu0 0
    %351 = vmatpush1.bf16.msra.mxu0 0
    %352 = vmatprep.subr.bf16.mxu0 0
    %353 = vmatpush1.bf16.msra.mxu0 0
    %354 = vmatprep.subr.bf16.mxu0 0
    %355 = vmatpush1.bf16.msra.mxu0 0
    %356 = vmatprep.subr.bf16.mxu0 0
    %357 = vmatpush1.bf16.msra.mxu0 0
    %358 = vmatprep.subr.bf16.mxu0 0
    %359 = vmatpush1.bf16.msra.mxu0 0
    %360 = vmatprep.subr.bf16.mxu0 0
    %361 = vmatpush1.bf16.msra.mxu0 0
    %362 = vmatprep.subr.bf16.mxu0 0
    %363 = vmatpush1.bf16.msra.mxu0 0
    %364 = vmatprep.mubr.bf16.mxu0 0
    %365 = vmatmul.mubr.bf16.gmra.mrb[0].mxu0 %v330
    %v366 = vpop.f32.mrb[0].mxu0
    %v367 = vadd.f32 %v328, %v366
    %v368 = vpop.f32.mrb[0].mxu0
    %v369 = vpop.f32.mrb[0].mxu0
    %v370 = vpop.f32.mrb[0].mxu0
    %371 = vdwg.mxu0
    %v372 = vtanh.pop %v367
    %v373 = vpack.c.bf16 %v372, %v372
    %s374 = scalar_lea.vmem %s0, 14
    %v375 = vld [vmem:[%s374] sm:$0x3]
    %v377 = vsel %vm46, %v373, 0
    %379 = vmatprep.subr.bf16.mxu0 0
    %380 = vmatpush1.bf16.msra.mxu0 %v42
    %381 = vmatprep.subr.bf16.mxu0 0
    %382 = vmatpush1.bf16.msra.mxu0 %v43
    %383 = vmatprep.subr.bf16.mxu0 0
    %384 = vmatpush1.bf16.msra.mxu0 0
    %385 = vmatprep.subr.bf16.mxu0 0
    %386 = vmatpush1.bf16.msra.mxu0 0
    %387 = vmatprep.subr.bf16.mxu0 0
    %388 = vmatpush1.bf16.msra.mxu0 0
    %389 = vmatprep.subr.bf16.mxu0 0
    %390 = vmatpush1.bf16.msra.mxu0 0
    %391 = vmatprep.subr.bf16.mxu0 0
    %392 = vmatpush1.bf16.msra.mxu0 0
    %393 = vmatprep.subr.bf16.mxu0 0
    %394 = vmatpush1.bf16.msra.mxu0 0
    %395 = vmatprep.subr.bf16.mxu0 0
    %396 = vmatpush1.bf16.msra.mxu0 0
    %397 = vmatprep.subr.bf16.mxu0 0
    %398 = vmatpush1.bf16.msra.mxu0 0
    %399 = vmatprep.subr.bf16.mxu0 0
    %400 = vmatpush1.bf16.msra.mxu0 0
    %401 = vmatprep.subr.bf16.mxu0 0
    %402 = vmatpush1.bf16.msra.mxu0 0
    %403 = vmatprep.subr.bf16.mxu0 0
    %404 = vmatpush1.bf16.msra.mxu0 0
    %405 = vmatprep.subr.bf16.mxu0 0
    %406 = vmatpush1.bf16.msra.mxu0 0
    %407 = vmatprep.subr.bf16.mxu0 0
    %408 = vmatpush1.bf16.msra.mxu0 0
    %409 = vmatprep.subr.bf16.mxu0 0
    %410 = vmatpush1.bf16.msra.mxu0 0
    %411 = vmatprep.mubr.bf16.mxu0 0
    %412 = vmatmul.mubr.bf16.gmra.mrb[0].mxu0 %v377
    %v413 = vpop.f32.mrb[0].mxu0
    %v414 = vadd.f32 %v375, %v413
    %v415 = vpop.f32.mrb[0].mxu0
    %v416 = vpop.f32.mrb[0].mxu0
    %v417 = vpop.f32.mrb[0].mxu0
    %418 = vdwg.mxu0
    %v419 = vtanh.pop %v414
    %vm420 = vcmask 254976
    %421 = vst.msk [vmem:[#allocation5] sm:$0x3] %vm420, %v419
    %v424 = vunpack.c.l.s4 1966171168
    %v425 = vunpack.c.0.s8 %v424
    %v426 = vlaneseq
    %v427 = vshrl.u32 %v426, 7
    %v428 = vsub.s32 %v425, %v427
    %v429 = vrot.slane %v90, %v428
    %v430 = vcombine.high %v429, %v429
    %v432 = vunpack.c.l.s4 1966171168
    %v433 = vunpack.c.0.s8 %v432
    %v434 = vlaneseq
    %v435 = vshrl.u32 %v434, 7
    %v436 = vsub.s32 %v433, %v435
    %v437 = vrot.slane %v429, %v436
    %v439 = vunpack.c.l.s4 1966171168
    %v440 = vunpack.c.0.s8 %v439
    %v441 = vlaneseq
    %v442 = vshrl.u32 %v441, 7
    %v443 = vsub.s32 %v440, %v442
    %v444 = vrot.slane %v430, %v443
    %v449 = vunpack.c.l.s4 1966171168
    %v450 = vunpack.c.0.s8 %v449
    %v451 = vlaneseq
    %v452 = vshrl.u32 %v451, 7
    %v453 = vsub.s32 %v450, %v452
    %v454 = vrot.slane %v137, %v453
    %v455 = vcombine.high %v454, %v454
    %v457 = vunpack.c.l.s4 1966171168
    %v458 = vunpack.c.0.s8 %v457
    %v459 = vlaneseq
    %v460 = vshrl.u32 %v459, 7
    %v461 = vsub.s32 %v458, %v460
    %v462 = vrot.slane %v454, %v461
    %v464 = vunpack.c.l.s4 1966171168
    %v465 = vunpack.c.0.s8 %v464
    %v466 = vlaneseq
    %v467 = vshrl.u32 %v466, 7
    %v468 = vsub.s32 %v465, %v467
    %v469 = vrot.slane %v455, %v468
    %v472 = vunpack.c.l.s4 1966171168
    %v473 = vunpack.c.0.s8 %v472
    %v474 = vlaneseq
    %v475 = vshrl.u32 %v474, 7
    %v476 = vsub.s32 %v473, %v475
    %v477 = vrot.slane %v184, %v476
    %v478 = vcombine.high %v477, %v477
    %v480 = vunpack.c.l.s4 1966171168
    %v481 = vunpack.c.0.s8 %v480
    %v482 = vlaneseq
    %v483 = vshrl.u32 %v482, 7
    %v484 = vsub.s32 %v481, %v483
    %v485 = vrot.slane %v477, %v484
    %v487 = vunpack.c.l.s4 1966171168
    %v488 = vunpack.c.0.s8 %v487
    %v489 = vlaneseq
    %v490 = vshrl.u32 %v489, 7
    %v491 = vsub.s32 %v488, %v490
    %v492 = vrot.slane %v478, %v491
    %v495 = vunpack.c.l.s4 1966171168
    %v496 = vunpack.c.0.s8 %v495
    %v497 = vlaneseq
    %v498 = vshrl.u32 %v497, 7
    %v499 = vsub.s32 %v496, %v498
    %v500 = vrot.slane %v231, %v499
    %v501 = vcombine.high %v500, %v500
    %v503 = vunpack.c.l.s4 1966171168
    %v504 = vunpack.c.0.s8 %v503
    %v505 = vlaneseq
    %v506 = vshrl.u32 %v505, 7
    %v507 = vsub.s32 %v504, %v506
    %v508 = vrot.slane %v500, %v507
    %v510 = vunpack.c.l.s4 1966171168
    %v511 = vunpack.c.0.s8 %v510
    %v512 = vlaneseq
    %v513 = vshrl.u32 %v512, 7
    %v514 = vsub.s32 %v511, %v513
    %v515 = vrot.slane %v501, %v514
    %v518 = vunpack.c.l.s4 1966171168
    %v519 = vunpack.c.0.s8 %v518
    %v520 = vlaneseq
    %v521 = vshrl.u32 %v520, 7
    %v522 = vsub.s32 %v519, %v521
    %v523 = vrot.slane %v278, %v522
    %v524 = vcombine.high %v523, %v523
    %v526 = vunpack.c.l.s4 1966171168
    %v527 = vunpack.c.0.s8 %v526
    %v528 = vlaneseq
    %v529 = vshrl.u32 %v528, 7
    %v530 = vsub.s32 %v527, %v529
    %v531 = vrot.slane %v523, %v530
    %v533 = vunpack.c.l.s4 1966171168
    %v534 = vunpack.c.0.s8 %v533
    %v535 = vlaneseq
    %v536 = vshrl.u32 %v535, 7
    %v537 = vsub.s32 %v534, %v536
    %v538 = vrot.slane %v524, %v537
    %v541 = vunpack.c.l.s4 1966171168
    %v542 = vunpack.c.0.s8 %v541
    %v543 = vlaneseq
    %v544 = vshrl.u32 %v543, 7
    %v545 = vsub.s32 %v542, %v544
    %v546 = vrot.slane %v325, %v545
    %v547 = vcombine.high %v546, %v546
    %v549 = vunpack.c.l.s4 1966171168
    %v550 = vunpack.c.0.s8 %v549
    %v551 = vlaneseq
    %v552 = vshrl.u32 %v551, 7
    %v553 = vsub.s32 %v550, %v552
    %v554 = vrot.slane %v546, %v553
    %v556 = vunpack.c.l.s4 1966171168
    %v557 = vunpack.c.0.s8 %v556
    %v558 = vlaneseq
    %v559 = vshrl.u32 %v558, 7
    %v560 = vsub.s32 %v557, %v559
    %v561 = vrot.slane %v547, %v560
    %v564 = vunpack.c.l.s4 1966171168
    %v565 = vunpack.c.0.s8 %v564
    %v566 = vlaneseq
    %v567 = vshrl.u32 %v566, 7
    %v568 = vsub.s32 %v565, %v567
    %v569 = vrot.slane %v372, %v568
    %v570 = vcombine.high %v569, %v569
    %v572 = vunpack.c.l.s4 1966171168
    %v573 = vunpack.c.0.s8 %v572
    %v574 = vlaneseq
    %v575 = vshrl.u32 %v574, 7
    %v576 = vsub.s32 %v573, %v575
    %v577 = vrot.slane %v569, %v576
    %v579 = vunpack.c.l.s4 1966171168
    %v580 = vunpack.c.0.s8 %v579
    %v581 = vlaneseq
    %v582 = vshrl.u32 %v581, 7
    %v583 = vsub.s32 %v580, %v582
    %v584 = vrot.slane %v570, %v583
    %v587 = vunpack.c.l.s4 1966171168
    %v588 = vunpack.c.0.s8 %v587
    %v589 = vlaneseq
    %v590 = vshrl.u32 %v589, 7
    %v591 = vsub.s32 %v588, %v590
    %v592 = vrot.slane %v419, %v591
    %v593 = vcombine.high %v592, %v592
    %v595 = vunpack.c.l.s4 1966171168
    %v596 = vunpack.c.0.s8 %v595
    %v597 = vlaneseq
    %v598 = vshrl.u32 %v597, 7
    %v599 = vsub.s32 %v596, %v598
    %v600 = vrot.slane %v592, %v599
    %v602 = vunpack.c.l.s4 1966171168
    %v603 = vunpack.c.0.s8 %v602
    %v604 = vlaneseq
    %v605 = vshrl.u32 %v604, 7
    %v606 = vsub.s32 %v603, %v605
    %v607 = vrot.slane %v593, %v606
    %v608 = vlaneseq
    %v609 = vshrl.u32 %v608, 7
    %v610 = vsub.s32 0, %v609
    %v611 = vrot.slane %v462, %v610
    %v612 = vlaneseq
    %v613 = vshrl.u32 %v612, 7
    %v614 = vsub.s32 0, %v613
    %v615 = vrot.slane %v469, %v614
    %v618 = vlaneseq
    %v619 = vshrl.u32 %v618, 7
    %v620 = vsub.s32 0, %v619
    %v621 = vrot.slane %v485, %v620
    %v622 = vlaneseq
    %v623 = vshrl.u32 %v622, 7
    %v624 = vsub.s32 0, %v623
    %v625 = vrot.slane %v492, %v624
    %v628 = vlaneseq
    %v629 = vshrl.u32 %v628, 7
    %v630 = vsub.s32 0, %v629
    %v631 = vrot.slane %v508, %v630
    %v632 = vlaneseq
    %v633 = vshrl.u32 %v632, 7
    %v634 = vsub.s32 0, %v633
    %v635 = vrot.slane %v515, %v634
    %v638 = vlaneseq
    %v639 = vshrl.u32 %v638, 7
    %v640 = vsub.s32 0, %v639
    %v641 = vrot.slane %v531, %v640
    %v642 = vlaneseq
    %v643 = vshrl.u32 %v642, 7
    %v644 = vsub.s32 0, %v643
    %v645 = vrot.slane %v538, %v644
    %v648 = vlaneseq
    %v649 = vshrl.u32 %v648, 7
    %v650 = vsub.s32 0, %v649
    %v651 = vrot.slane %v554, %v650
    %v652 = vlaneseq
    %v653 = vshrl.u32 %v652, 7
    %v654 = vsub.s32 0, %v653
    %v655 = vrot.slane %v561, %v654
    %v658 = vlaneseq
    %v659 = vshrl.u32 %v658, 7
    %v660 = vsub.s32 0, %v659
    %v661 = vrot.slane %v577, %v660
    %v662 = vlaneseq
    %v663 = vshrl.u32 %v662, 7
    %v664 = vsub.s32 0, %v663
    %v665 = vrot.slane %v584, %v664
    %v668 = vlaneseq
    %v669 = vshrl.u32 %v668, 7
    %v670 = vsub.s32 0, %v669
    %v671 = vrot.slane %v600, %v670
    %v672 = vlaneseq
    %v673 = vshrl.u32 %v672, 7
    %v674 = vsub.s32 0, %v673
    %v675 = vrot.slane %v607, %v674
    %vm678 = vcmask 1040384
    %v679 = vsel %vm678, %v437, %v611
    %v680 = vsel %vm678, %v444, %v615
    %vm681 = vcmask 1041408
    %v682 = vsel %vm681, %v679, %v621
    %v683 = vsel %vm681, %v680, %v625
    %vm684 = vcmask 1042432
    %v685 = vsel %vm684, %v682, %v631
    %v686 = vsel %vm684, %v683, %v635
    %vm687 = vcmask 1043456
    %v688 = vsel %vm687, %v685, %v641
    %v689 = vsel %vm687, %v686, %v645
    %vm690 = vcmask 1044480
    %v691 = vsel %vm690, %v688, %v651
    %v692 = vsel %vm690, %v689, %v655
    %vm693 = vcmask 1045504
    %v694 = vsel %vm693, %v691, %v661
    %v695 = vsel %vm693, %v692, %v665
    %vm696 = vcmask 1046528
    %v697 = vsel %vm696, %v694, %v671
    %v698 = vsel %vm696, %v695, %v675
    %v699 = vld [vmem:[%s3] sm:$0x1]
    %v701 = vlaneseq
    %v702 = vshrl.u32 %v701, 7
    %v703 = vsub.s32 0, %v702
    %v704 = vrot.slane %v699, %v703
    %v706 = vmul.f32 %v697, %v704
    %v707 = vmul.f32 %v698, %v704
    %v708 = vsel %vm46, %v706, 0.0
    %709 = vadd.xlane.f32.xlu0 %v708
    %v710 = vpop.xlane.xlu0 %709
    %v711 = vsel %vm46, %v707, 0.0
    %712 = vadd.xlane.f32.xlu0 %v711
    %v713 = vpop.xlane.xlu0 %712
    %v714 = vld [vmem:[#allocation2] sm:$0x1]
    %v716 = vlaneseq
    %v717 = vshrl.u32 %v716, 7
    %v718 = vsub.s32 0, %v717
    %v719 = vrot.slane %v714, %v718
    %720 = vset.pattern.permute.xlu0 0
    %721 = vperm.xlu0 %720, %v719
    %v722 = vpop.permute.xlu0 %721
    %v724 = vadd.f32 %v710, %v722
    %v725 = vadd.f32 %v713, %v722
    %v728 = vlaneseq
    %v729 = vand.u32 %v728, 127
    %v730 = vlaneseq
    %v731 = vshrl.u32 %v730, 7
    %v732 = vsub.s32 %v729, %v731
    %v733 = vrot.slane %v724, %v732
    %v734 = vlaneseq
    %v735 = vshrl.u32 %v734, 7
    %v736 = vsub.s32 %v729, %v735
    %v737 = vrot.slane %v725, %v736
    %vm738 = vcmask 1041409
    %v739 = vsel %vm738, %v737, %v733
    %vm741 = vcmask 58368
    %742 = vst.msk [vmem:[#allocation3] sm:$0x3] %vm741, %v739
    // Predicated region
    $region22: #{rnn_forward.1} parent=1 // pred_check
      _
    $region23: #{rnn_forward.1} parent=1 // pred_check_branch
      %744 = sbr.rel (0) target = $region25
    $region24: #{rnn_forward.1} parent=1 // pred_region
      %s746 = ssub.s32 32, 32
      %747 = vsyncadd [#allocation4], %s746
      %s749 = sshll.u32 [#allocation3], 4
      %s750 = int_to_ptr.vmem [resolvable:$true] %s749
      %752 = dma.vmem_to_hbm [thread:$0]  %s750, 32, %s5, [#allocation4]
    $region25: #{rnn_forward.1} parent=1 // pred_fallthru
      _
    // Predicated region
    $region26: #{rnn_forward.1} parent=1 // pred_check
      _
    $region27: #{rnn_forward.1} parent=1 // pred_check_branch
      %754 = sbr.rel (0) target = $region29
    $region28: #{rnn_forward.1} parent=1 // pred_region
      %s756 = ssub.s32 32, 32
      %757 = vsyncadd [#allocation6], %s756
      %s759 = sshll.u32 [#allocation5], 4
      %s760 = int_to_ptr.vmem [resolvable:$true] %s759
      %762 = dma.vmem_to_hbm [thread:$0]  %s760, 32, %s6, [#allocation6]
    $region29: #{rnn_forward.1} parent=1 // pred_fallthru
      _
    // Predicated region
    $region30: #{rnn_forward.1} parent=1 // pred_check
      _
    $region31: #{rnn_forward.1} parent=1 // pred_check_branch
      %764 = sbr.rel (0) target = $region33
    $region32: #{rnn_forward.1} parent=1 // pred_region
      %765 = dma.done [#allocation4], 32
    $region33: #{rnn_forward.1} parent=1 // pred_fallthru
      _
    // Predicated region
    $region34: #{rnn_forward.1} parent=1 // pred_check
      _
    $region35: #{rnn_forward.1} parent=1 // pred_check_branch
      %767 = sbr.rel (0) target = $region37
    $region36: #{rnn_forward.1} parent=1 // pred_region
      %768 = dma.done [#allocation6], 32
    $region37: #{rnn_forward.1} parent=1 // pred_fallthru
      _
    %769 = vsyncpa [#allocation4], 1
    %770 = vsyncpa [#allocation6], 1

</llo_original>
